<compile_context>
chip_gen: v5e
topology: v5e:2x2
jax: 0.10.0
libtpu: 0.0.40
codegen_flags: <defaults>
</compile_context>

<pallas_src>
import jax
import jax.numpy as jnp
from jax.experimental import pallas as pl
from jax.experimental.pallas import tpu as pltpu

_LANE = 128


# ---------------- fused Pallas kernel ----------------

def _mlp_fused_kernel(x_ref, w1_ref, w2_ref, w3_ref, w4_ref, w5_ref,
                      shifts_ref, b5_ref, o_ref):
    shifts = shifts_ref[...]                 # single (4, M) load, rows indexed below
    h = x_ref[...]                           # f32 activations

    def layer(h, w_ref, row):
        # BN scale is pre-folded into the (bf16) weight; f32 accumulation on the MXU,
        # per-feature shift add + ReLU stay in f32 on the VPU.
        y = jnp.dot(h.astype(w_ref.dtype), w_ref[...],
                    preferred_element_type=jnp.float32)
        return jnp.maximum(y + shifts[row:row + 1, :], 0.0)

    h = layer(h, w1_ref, 0)
    h = layer(h, w2_ref, 1)
    h = layer(h, w3_ref, 2)
    h = layer(h, w4_ref, 3)

    # Layer 5: plain Linear with bias (lane-dense padded output).
    o_ref[...] = (
        jnp.dot(h.astype(w5_ref.dtype), w5_ref[...],
                preferred_element_type=jnp.float32)
        + b5_ref[...]).astype(o_ref.dtype)


# ---------------- wrapper ----------------

def _choose_tb(B, max_tb=512):
    """Batch tile: full batch for tiny B; otherwise >=2 grid steps (v7x has 2 TCs),
    rows a multiple of 8 (sublane), capped for VMEM / per-step overhead amortization."""
    if B <= 16:
        return B
    tb = min(max_tb, -(-B // 2))     # ceil(B/2) -> at least 2 grid steps
    tb = max(8, (tb // 8) * 8)
    return tb


def mlp_forward_fused(fused, x, *, max_tb=512):
    """x: (B, Din) f32 -> (B, Dout) f32. Entire 5-layer MLP in one pallas_call."""
    B, Din = x.shape
    M = fused["w1"].shape[1]
    Dout_pad = fused["w5"].shape[1]
    Dout = fused["out_dim"]

    tb = _choose_tb(B, max_tb)
    nb = pl.cdiv(B, tb)
    Bp = nb * tb
    xp = x if Bp == B else jnp.pad(x, ((0, Bp - B), (0, 0)))

    def _full(shape):
        # Whole-array block, resident in VMEM, same block every grid step.
        return pl.BlockSpec(shape, lambda i: (0, 0))

    # VMEM guard: only raise the scoped limit if the (double-buffered) resident
    # footprint would exceed the ~32 MiB default. No-op at this model size.
    param_keys = ("w1", "w2", "w3", "w4", "w5", "shifts", "b5")
    weight_bytes = sum(int(fused[k].size) * fused[k].dtype.itemsize for k in param_keys)
    act_bytes = tb * (Din + M + Dout_pad) * 4
    need = 2 * (weight_bytes + act_bytes) + (1 << 20)
    vmem_limit = need if need > (32 << 20) else None

    out = pl.pallas_call(
        _mlp_fused_kernel,
        out_shape=jax.ShapeDtypeStruct((Bp, Dout_pad), jnp.float32),
        grid_spec=pltpu.PrefetchScalarGridSpec(
            num_scalar_prefetch=0,
            grid=(nb,),
            in_specs=[
                pl.BlockSpec((tb, Din), lambda i: (i, 0)),   # x (batch-tiled)
                _full((Din, M)),                             # w1_eff (bf16)
                _full((M, M)),                               # w2_eff (bf16)
                _full((M, M)),                               # w3_eff (bf16)
                _full((M, M)),                               # w4_eff (bf16)
                _full((M, Dout_pad)),                        # w5 (bf16, lane-padded)
                _full((4, M)),                               # packed shifts (f32)
                _full((1, Dout_pad)),                        # fc5 bias (f32, padded)
            ],
            out_specs=pl.BlockSpec((tb, Dout_pad), lambda i: (i, 0)),
        ),
        compiler_params=pltpu.CompilerParams(
            dimension_semantics=("parallel",),
            vmem_limit_bytes=vmem_limit),
    )(xp, fused["w1"], fused["w2"], fused["w3"], fused["w4"], fused["w5"],
      fused["shifts"], fused["b5"])

    return out[:B, :Dout]


# ---------------- parameter setup (deterministic, synthetic) ----------------

def init_raw_params(key, input_dim, output_dim, middle_dim, eps=1e-5):
    """Raw (unfused) f32 params mirroring the PyTorch module in eval mode."""
    dims = [(input_dim, middle_dim),
            (middle_dim, middle_dim),
            (middle_dim, middle_dim),
            (middle_dim, middle_dim)]
    raw = {}
    for idx, (din, dout) in enumerate(dims, start=1):
        key, kw, kg, kb, km, kv = jax.random.split(key, 6)
        w_t = jax.random.normal(kw, (din, dout), jnp.float32) * 0.05  # Linear weight^T
        gamma = 1.0 + 0.1 * jax.random.normal(kg, (dout,), jnp.float32)
        beta = 0.1 * jax.random.normal(kb, (dout,), jnp.float32)
        running_mean = 0.1 * jax.random.normal(km, (dout,), jnp.float32)
        running_var = jnp.abs(jax.random.normal(kv, (dout,), jnp.float32)) + 0.5
        # BatchNorm1d (eval): y = (x - mean)/sqrt(var+eps)*gamma + beta
        scale = gamma / jnp.sqrt(running_var + eps)
        shift = beta - running_mean * scale
        raw[f"fc{idx}_wt"] = w_t
        raw[f"bn{idx}_scale"] = scale
        raw[f"bn{idx}_shift"] = shift
    key, kw5, kb5 = jax.random.split(key, 3)
    raw["fc5_wt"] = jax.random.normal(kw5, (middle_dim, output_dim), jnp.float32) * 0.05
    raw["fc5_b"] = 0.1 * jax.random.normal(kb5, (output_dim,), jnp.float32)
    return raw


def fuse_params(raw, *, weight_dtype=jnp.bfloat16):
    """Fold BN scale into the weights (in f32), cast weights to bf16, pack the 4 shifts
    into one (4, M) f32 array, and zero-pad the output dim of w5/b5 to a lane multiple."""
    fused = {}
    shifts = []
    for idx in range(1, 5):
        w_eff = raw[f"fc{idx}_wt"] * raw[f"bn{idx}_scale"][None, :]
        fused[f"w{idx}"] = w_eff.astype(weight_dtype)
        shifts.append(raw[f"bn{idx}_shift"])
    fused["shifts"] = jnp.stack(shifts, axis=0)                  # (4, M) f32

    out_dim = raw["fc5_wt"].shape[1]
    dout_pad = max(_LANE, ((out_dim + _LANE - 1) // _LANE) * _LANE)
    pad = dout_pad - out_dim
    fused["w5"] = jnp.pad(raw["fc5_wt"], ((0, 0), (0, pad))).astype(weight_dtype)
    fused["b5"] = jnp.pad(raw["fc5_b"], (0, pad)).reshape(1, -1)  # (1, dout_pad) f32
    fused["out_dim"] = out_dim
    return fused


# ---------------- reference (pure JAX, unfused, f32 weights) ----------------

def mlp_forward_ref(raw, x):
    out = x
    for idx in range(1, 5):
        out = out @ raw[f"fc{idx}_wt"]
        out = out * raw[f"bn{idx}_scale"][None, :] + raw[f"bn{idx}_shift"][None, :]
        out = jnp.maximum(out, 0.0)
    return out @ raw["fc5_wt"] + raw["fc5_b"][None, :]


if __name__ == "__main__":
    # Small shapes consistent with mlp_model(input_dim=32, output_dim=16, middle_dim=128).
    B, INPUT_DIM, OUTPUT_DIM, MIDDLE_DIM = 8, 32, 16, 128

    key = jax.random.PRNGKey(0)
    key, kx = jax.random.split(key)
    x = jax.random.normal(kx, (B, INPUT_DIM), jnp.float32)

    raw = init_raw_params(key, INPUT_DIM, OUTPUT_DIM, MIDDLE_DIM)
    fused = fuse_params(raw)

    out = mlp_forward_fused(fused, x)
    out = jax.block_until_ready(out)

    ref = mlp_forward_ref(raw, x)
    assert out.shape == (B, OUTPUT_DIM)
    # Tolerance accounts for bf16 weight quantization (kernel) vs. f32 weights (reference);
    # observed differences are ~1e-3 at these magnitudes.
    assert jnp.allclose(out, ref, atol=1e-2, rtol=1e-2)

    print("KERNEL_OK")
</pallas_src>

<mosaic_0001>
module attributes {stable_mosaic.version = 11 : i64} {
  func.func @_mlp_fused_kernel(%arg0: i32, %arg1: memref<8x32xf32, #tpu.memory_space<vmem>>, %arg2: memref<32x128xbf16, #tpu.memory_space<vmem>>, %arg3: memref<128x128xbf16, #tpu.memory_space<vmem>>, %arg4: memref<128x128xbf16, #tpu.memory_space<vmem>>, %arg5: memref<128x128xbf16, #tpu.memory_space<vmem>>, %arg6: memref<128x128xbf16, #tpu.memory_space<vmem>>, %arg7: memref<4x128xf32, #tpu.memory_space<vmem>>, %arg8: memref<1x128xf32, #tpu.memory_space<vmem>>, %arg9: memref<8x128xf32, #tpu.memory_space<vmem>>) attributes {dimension_semantics = [#tpu.dimension_semantics<parallel>], iteration_bounds = array<i64: 1>, scalar_prefetch = 0 : i64, scratch_operands = 0 : i64, tpu.core_type = #tpu.core_type<tc>, window_params = [{transform_indices = @transform_0, window_bounds = array<i64: 8, 32>}, {pipeline_mode = #tpu.pipeline_mode<synchronous>, transform_indices = @transform_1, window_bounds = array<i64: 32, 128>}, {pipeline_mode = #tpu.pipeline_mode<synchronous>, transform_indices = @transform_2, window_bounds = array<i64: 128, 128>}, {pipeline_mode = #tpu.pipeline_mode<synchronous>, transform_indices = @transform_3, window_bounds = array<i64: 128, 128>}, {pipeline_mode = #tpu.pipeline_mode<synchronous>, transform_indices = @transform_4, window_bounds = array<i64: 128, 128>}, {pipeline_mode = #tpu.pipeline_mode<synchronous>, transform_indices = @transform_5, window_bounds = array<i64: 128, 128>}, {pipeline_mode = #tpu.pipeline_mode<synchronous>, transform_indices = @transform_6, window_bounds = array<i64: 4, 128>}, {pipeline_mode = #tpu.pipeline_mode<synchronous>, transform_indices = @transform_7, window_bounds = array<i64: 1, 128>}, {transform_indices = @transform_8, window_bounds = array<i64: 8, 128>}]} {
    %c0 = arith.constant 0 : index
    %c0_0 = arith.constant 0 : index
    %0 = vector.load %arg7[%c0, %c0_0] : memref<4x128xf32, #tpu.memory_space<vmem>>, vector<4x128xf32>
    %c0_1 = arith.constant 0 : index
    %c0_2 = arith.constant 0 : index
    %1 = vector.load %arg1[%c0_1, %c0_2] : memref<8x32xf32, #tpu.memory_space<vmem>>, vector<8x32xf32>
    %2 = arith.truncf %1 : vector<8x32xf32> to vector<8x32xbf16>
    %c0_3 = arith.constant 0 : index
    %c0_4 = arith.constant 0 : index
    %3 = vector.load %arg2[%c0_3, %c0_4] : memref<32x128xbf16, #tpu.memory_space<vmem>>, vector<32x128xbf16>
    %cst = arith.constant dense<0.000000e+00> : vector<8x128xf32>
    %4 = tpu.matmul %2, %3, %cst {dimension_numbers = #tpu.dot_dimension_numbers<[1], [0], [0], [1], [0, 0, 1, 1], [], []>} : vector<8x32xbf16>, vector<32x128xbf16>, vector<8x128xf32> -> vector<8x128xf32>
    %5 = vector.extract_strided_slice %0 {offsets = [0, 0], sizes = [1, 128], strides = [1, 1]} : vector<4x128xf32> to vector<1x128xf32>
    %6 = vector.broadcast %5 : vector<1x128xf32> to vector<8x128xf32>
    %7 = arith.addf %4, %6 : vector<8x128xf32>
    %cst_5 = arith.constant 0.000000e+00 : f32
    %8 = vector.broadcast %cst_5 : f32 to vector<8x128xf32>
    %9 = arith.maximumf %7, %8 : vector<8x128xf32>
    %10 = arith.truncf %9 : vector<8x128xf32> to vector<8x128xbf16>
    %c0_6 = arith.constant 0 : index
    %c0_7 = arith.constant 0 : index
    %11 = vector.load %arg3[%c0_6, %c0_7] : memref<128x128xbf16, #tpu.memory_space<vmem>>, vector<128x128xbf16>
    %cst_8 = arith.constant dense<0.000000e+00> : vector<8x128xf32>
    %12 = tpu.matmul %10, %11, %cst_8 {dimension_numbers = #tpu.dot_dimension_numbers<[1], [0], [0], [1], [0, 0, 1, 1], [], []>} : vector<8x128xbf16>, vector<128x128xbf16>, vector<8x128xf32> -> vector<8x128xf32>
    %13 = vector.extract_strided_slice %0 {offsets = [1, 0], sizes = [1, 128], strides = [1, 1]} : vector<4x128xf32> to vector<1x128xf32>
    %14 = vector.broadcast %13 : vector<1x128xf32> to vector<8x128xf32>
    %15 = arith.addf %12, %14 : vector<8x128xf32>
    %cst_9 = arith.constant 0.000000e+00 : f32
    %16 = vector.broadcast %cst_9 : f32 to vector<8x128xf32>
    %17 = arith.maximumf %15, %16 : vector<8x128xf32>
    %18 = arith.truncf %17 : vector<8x128xf32> to vector<8x128xbf16>
    %c0_10 = arith.constant 0 : index
    %c0_11 = arith.constant 0 : index
    %19 = vector.load %arg4[%c0_10, %c0_11] : memref<128x128xbf16, #tpu.memory_space<vmem>>, vector<128x128xbf16>
    %cst_12 = arith.constant dense<0.000000e+00> : vector<8x128xf32>
    %20 = tpu.matmul %18, %19, %cst_12 {dimension_numbers = #tpu.dot_dimension_numbers<[1], [0], [0], [1], [0, 0, 1, 1], [], []>} : vector<8x128xbf16>, vector<128x128xbf16>, vector<8x128xf32> -> vector<8x128xf32>
    %21 = vector.extract_strided_slice %0 {offsets = [2, 0], sizes = [1, 128], strides = [1, 1]} : vector<4x128xf32> to vector<1x128xf32>
    %22 = vector.broadcast %21 : vector<1x128xf32> to vector<8x128xf32>
    %23 = arith.addf %20, %22 : vector<8x128xf32>
    %cst_13 = arith.constant 0.000000e+00 : f32
    %24 = vector.broadcast %cst_13 : f32 to vector<8x128xf32>
    %25 = arith.maximumf %23, %24 : vector<8x128xf32>
    %26 = arith.truncf %25 : vector<8x128xf32> to vector<8x128xbf16>
    %c0_14 = arith.constant 0 : index
    %c0_15 = arith.constant 0 : index
    %27 = vector.load %arg5[%c0_14, %c0_15] : memref<128x128xbf16, #tpu.memory_space<vmem>>, vector<128x128xbf16>
    %cst_16 = arith.constant dense<0.000000e+00> : vector<8x128xf32>
    %28 = tpu.matmul %26, %27, %cst_16 {dimension_numbers = #tpu.dot_dimension_numbers<[1], [0], [0], [1], [0, 0, 1, 1], [], []>} : vector<8x128xbf16>, vector<128x128xbf16>, vector<8x128xf32> -> vector<8x128xf32>
    %29 = vector.extract_strided_slice %0 {offsets = [3, 0], sizes = [1, 128], strides = [1, 1]} : vector<4x128xf32> to vector<1x128xf32>
    %30 = vector.broadcast %29 : vector<1x128xf32> to vector<8x128xf32>
    %31 = arith.addf %28, %30 : vector<8x128xf32>
    %cst_17 = arith.constant 0.000000e+00 : f32
    %32 = vector.broadcast %cst_17 : f32 to vector<8x128xf32>
    %33 = arith.maximumf %31, %32 : vector<8x128xf32>
    %34 = arith.truncf %33 : vector<8x128xf32> to vector<8x128xbf16>
    %c0_18 = arith.constant 0 : index
    %c0_19 = arith.constant 0 : index
    %35 = vector.load %arg6[%c0_18, %c0_19] : memref<128x128xbf16, #tpu.memory_space<vmem>>, vector<128x128xbf16>
    %cst_20 = arith.constant dense<0.000000e+00> : vector<8x128xf32>
    %36 = tpu.matmul %34, %35, %cst_20 {dimension_numbers = #tpu.dot_dimension_numbers<[1], [0], [0], [1], [0, 0, 1, 1], [], []>} : vector<8x128xbf16>, vector<128x128xbf16>, vector<8x128xf32> -> vector<8x128xf32>
    %c0_21 = arith.constant 0 : index
    %c0_22 = arith.constant 0 : index
    %37 = vector.load %arg8[%c0_21, %c0_22] : memref<1x128xf32, #tpu.memory_space<vmem>>, vector<1x128xf32>
    %38 = vector.broadcast %37 : vector<1x128xf32> to vector<8x128xf32>
    %39 = arith.addf %36, %38 : vector<8x128xf32>
    %c0_23 = arith.constant 0 : index
    %c0_24 = arith.constant 0 : index
    %40 = vector.load %arg9[%c0_23, %c0_24] : memref<8x128xf32, #tpu.memory_space<vmem>>, vector<8x128xf32>
    tpu.vector_store %arg9[%c0_23, %c0_24], %39 {strides = array<i32>} : memref<8x128xf32, #tpu.memory_space<vmem>>, vector<8x128xf32>,
    return
  }
  func.func @transform_0(%arg0: i32) -> (i32, i32) {
    %c0_i32 = arith.constant 0 : i32
    %c0_i32_0 = arith.constant 0 : i32
    return %arg0, %c0_i32 : i32, i32
  }
  func.func @transform_1(%arg0: i32) -> (i32, i32) {
    %c0_i32 = arith.constant 0 : i32
    %c0_i32_0 = arith.constant 0 : i32
    %c0_i32_1 = arith.constant 0 : i32
    return %c0_i32, %c0_i32_0 : i32, i32
  }
  func.func @transform_2(%arg0: i32) -> (i32, i32) {
    %c0_i32 = arith.constant 0 : i32
    %c0_i32_0 = arith.constant 0 : i32
    %c0_i32_1 = arith.constant 0 : i32
    return %c0_i32, %c0_i32_0 : i32, i32
  }
  func.func @transform_3(%arg0: i32) -> (i32, i32) {
    %c0_i32 = arith.constant 0 : i32
    %c0_i32_0 = arith.constant 0 : i32
    %c0_i32_1 = arith.constant 0 : i32
    return %c0_i32, %c0_i32_0 : i32, i32
  }
  func.func @transform_4(%arg0: i32) -> (i32, i32) {
    %c0_i32 = arith.constant 0 : i32
    %c0_i32_0 = arith.constant 0 : i32
    %c0_i32_1 = arith.constant 0 : i32
    return %c0_i32, %c0_i32_0 : i32, i32
  }
  func.func @transform_5(%arg0: i32) -> (i32, i32) {
    %c0_i32 = arith.constant 0 : i32
    %c0_i32_0 = arith.constant 0 : i32
    %c0_i32_1 = arith.constant 0 : i32
    return %c0_i32, %c0_i32_0 : i32, i32
  }
  func.func @transform_6(%arg0: i32) -> (i32, i32) {
    %c0_i32 = arith.constant 0 : i32
    %c0_i32_0 = arith.constant 0 : i32
    %c0_i32_1 = arith.constant 0 : i32
    return %c0_i32, %c0_i32_0 : i32, i32
  }
  func.func @transform_7(%arg0: i32) -> (i32, i32) {
    %c0_i32 = arith.constant 0 : i32
    %c0_i32_0 = arith.constant 0 : i32
    %c0_i32_1 = arith.constant 0 : i32
    return %c0_i32, %c0_i32_0 : i32, i32
  }
  func.func @transform_8(%arg0: i32) -> (i32, i32) {
    %c0_i32 = arith.constant 0 : i32
    %c0_i32_0 = arith.constant 0 : i32
    return %arg0, %c0_i32 : i32, i32
  }
}

</mosaic_0001>

<llo_original>
// kernel: tpu_custom_call.1
$region0: #{tpu_custom_call.1}
  #allocation0 [shape = 'u32[]', space=smem, size = 0x4, offset = 0x4, fixed_abs, tag = 'smem constant byte address 0x4 - core index']
  #allocation1 [shape = 'u32[72,128]{1,0:T(1,128)}', space=vmem, size = 0x9000, scoped, tag = 'internal scratch']
  %s0 = inlined_call_operand.hbm [shape: f32[8,32], index: 0, kind: input, shape index: {}]
  %s1 = inlined_call_operand.hbm [shape: bf16[32,128], index: 1, kind: input, shape index: {}]
  %s2 = inlined_call_operand.hbm [shape: bf16[128,128], index: 2, kind: input, shape index: {}]
  %s3 = inlined_call_operand.hbm [shape: bf16[128,128], index: 3, kind: input, shape index: {}]
  %s4 = inlined_call_operand.hbm [shape: bf16[128,128], index: 4, kind: input, shape index: {}]
  %s5 = inlined_call_operand.hbm [shape: bf16[128,128], index: 5, kind: input, shape index: {}]
  %s6 = inlined_call_operand.vmem [shape: f32[4,128], index: 6, kind: input, shape index: {}]
  %s7 = inlined_call_operand.vmem [shape: f32[1,128], index: 7, kind: input, shape index: {}]
  %s8 = inlined_call_operand.hbm [shape: f32[8,128], index: 8, kind: output, shape index: {}]
  %s9 = sld [smem:[#allocation0]]
  $region66: #{tpu_custom_call.1} parent=0
    _
  %s11 = ssub.s32 1, %s9
  %s12 = scalar_select 0, %s11, %s9
  $region1: #{tpu_custom_call.1} parent=0
    #allocation2 [shape = 'u8[4096]{0}', space=vmem, size = 0x1000, scoped, tag = 'input window, operand 0, single buffered']
    #allocation3 [shape = 's32[1]{0}', space=sflag, size = 0x4, scoped, tag = 'scoped memory for tpu_custom_call.1']
    #allocation4 [shape = 's32[1]{0}', space=sflag, size = 0x4, scoped, tag = 'scoped memory for tpu_custom_call.1']
    #allocation5 [shape = 'u8[8192]{0}', space=vmem, size = 0x2000, scoped, tag = 'input window, operand 1, single buffered']
    #allocation6 [shape = 's32[1]{0}', space=sflag, size = 0x4, scoped, tag = 'scoped memory for tpu_custom_call.1']
    #allocation7 [shape = 'u8[32768]{0}', space=vmem, size = 0x8000, scoped, tag = 'input window, operand 2, single buffered']
    #allocation8 [shape = 'u8[32768]{0}', space=vmem, size = 0x8000, scoped, tag = 'input window, operand 3, single buffered']
    #allocation9 [shape = 's32[1]{0}', space=sflag, size = 0x4, scoped, tag = 'scoped memory for tpu_custom_call.1']
    #allocation10 [shape = 'u8[32768]{0}', space=vmem, size = 0x8000, scoped, tag = 'input window, operand 4, single buffered']
    #allocation11 [shape = 'u8[32768]{0}', space=vmem, size = 0x8000, scoped, tag = 'input window, operand 5, single buffered']
    #allocation12 [shape = 's32[1]{0}', space=sflag, size = 0x4, scoped, tag = 'scoped memory for tpu_custom_call.1']
    #allocation13 [shape = 'u8[4096]{0}', space=vmem, size = 0x1000, scoped, tag = 'output window, operand 0, single buffered']
    %13 = vsyncpa [#allocation3], 0
    %14 = vsyncpa [#allocation6], 0
    %15 = vsyncpa [#allocation9], 0
    %16 = vsyncpa [#allocation12], 0
    %17 = vsyncpa [#allocation4], 0
    // Predicated region
    $region2: #{tpu_custom_call.1} parent=1 // pred_check
      _
    $region3: #{tpu_custom_call.1} parent=1 // pred_check_branch
      %19 = sbr.rel (0) target = $region5
    $region4: #{tpu_custom_call.1} parent=1 // pred_region
      %21 = vsyncadd [#allocation3], 0
      %s23 = sshll.u32 %s0, 4
      %s24 = int_to_ptr.hbm [resolvable:$true] %s23
      %s25 = sshll.u32 [#allocation2], 4
      %s26 = int_to_ptr.vmem [resolvable:$true] %s25
      %28 = dma.hbm_to_vmem [thread:$0]  %s24, 128, %s26, [#allocation3]
    $region5: #{tpu_custom_call.1} parent=1 // pred_fallthru
      _
    // Predicated region
    $region6: #{tpu_custom_call.1} parent=1 // pred_check
      _
    $region7: #{tpu_custom_call.1} parent=1 // pred_check_branch
      %30 = sbr.rel (0) target = $region9
    $region8: #{tpu_custom_call.1} parent=1 // pred_region
      %32 = vsyncadd [#allocation6], 0
      %s33 = sshll.u32 %s1, 4
      %s34 = int_to_ptr.hbm [resolvable:$true] %s33
      %s35 = sshll.u32 [#allocation5], 4
      %s36 = int_to_ptr.vmem [resolvable:$true] %s35
      %41 = dma.hbm_to_vmem [thread:$0]  %s34, 256, %s36, [#allocation6], 64, 64, 4
    $region9: #{tpu_custom_call.1} parent=1 // pred_fallthru
      _
    // Predicated region
    $region10: #{tpu_custom_call.1} parent=1 // pred_check
      _
    $region11: #{tpu_custom_call.1} parent=1 // pred_check_branch
      %43 = sbr.rel (0) target = $region13
    $region12: #{tpu_custom_call.1} parent=1 // pred_region
      %45 = vsyncadd [#allocation6], 0
      %s46 = sshll.u32 %s2, 4
      %s47 = int_to_ptr.hbm [resolvable:$true] %s46
      %s48 = sshll.u32 [#allocation7], 4
      %s49 = int_to_ptr.vmem [resolvable:$true] %s48
      %54 = dma.hbm_to_vmem [thread:$0]  %s47, 1024, %s49, [#allocation6], 64, 64, 4
    $region13: #{tpu_custom_call.1} parent=1 // pred_fallthru
      _
    // Predicated region
    $region14: #{tpu_custom_call.1} parent=1 // pred_check
      _
    $region15: #{tpu_custom_call.1} parent=1 // pred_check_branch
      %56 = sbr.rel (0) target = $region17
    $region16: #{tpu_custom_call.1} parent=1 // pred_region
      %58 = vsyncadd [#allocation9], 0
      %s59 = sshll.u32 %s3, 4
      %s60 = int_to_ptr.hbm [resolvable:$true] %s59
      %s61 = sshll.u32 [#allocation8], 4
      %s62 = int_to_ptr.vmem [resolvable:$true] %s61
      %67 = dma.hbm_to_vmem [thread:$0]  %s60, 1024, %s62, [#allocation9], 64, 64, 4
    $region17: #{tpu_custom_call.1} parent=1 // pred_fallthru
      _
    // Predicated region
    $region18: #{tpu_custom_call.1} parent=1 // pred_check
      _
    $region19: #{tpu_custom_call.1} parent=1 // pred_check_branch
      %69 = sbr.rel (0) target = $region21
    $region20: #{tpu_custom_call.1} parent=1 // pred_region
      %71 = vsyncadd [#allocation9], 0
      %s72 = sshll.u32 %s4, 4
      %s73 = int_to_ptr.hbm [resolvable:$true] %s72
      %s74 = sshll.u32 [#allocation10], 4
      %s75 = int_to_ptr.vmem [resolvable:$true] %s74
      %80 = dma.hbm_to_vmem [thread:$0]  %s73, 1024, %s75, [#allocation9], 64, 64, 4
    $region21: #{tpu_custom_call.1} parent=1 // pred_fallthru
      _
    // Predicated region
    $region22: #{tpu_custom_call.1} parent=1 // pred_check
      _
    $region23: #{tpu_custom_call.1} parent=1 // pred_check_branch
      %82 = sbr.rel (0) target = $region25
    $region24: #{tpu_custom_call.1} parent=1 // pred_region
      %84 = vsyncadd [#allocation12], 0
      %s85 = sshll.u32 %s5, 4
      %s86 = int_to_ptr.hbm [resolvable:$true] %s85
      %s87 = sshll.u32 [#allocation11], 4
      %s88 = int_to_ptr.vmem [resolvable:$true] %s87
      %93 = dma.hbm_to_vmem [thread:$0]  %s86, 1024, %s88, [#allocation12], 64, 64, 4
    $region25: #{tpu_custom_call.1} parent=1 // pred_fallthru
      _
    // Predicated region
    $region26: #{tpu_custom_call.1} parent=1 // pred_check
      _
    $region27: #{tpu_custom_call.1} parent=1 // pred_check_branch
      %95 = sbr.rel (0) target = $region29
    $region28: #{tpu_custom_call.1} parent=1 // pred_region
      _
    $region29: #{tpu_custom_call.1} parent=1 // pred_fallthru
      _
    // Predicated region
    $region30: #{tpu_custom_call.1} parent=1 // pred_check
      _
    $region31: #{tpu_custom_call.1} parent=1 // pred_check_branch
      %97 = sbr.rel (0) target = $region33
    $region32: #{tpu_custom_call.1} parent=1 // pred_region
      _
    $region33: #{tpu_custom_call.1} parent=1 // pred_fallthru
      _
    // Predicated region
    $region34: #{tpu_custom_call.1} parent=1 // pred_check
      _
    $region35: #{tpu_custom_call.1} parent=1 // pred_check_branch
      %99 = sbr.rel (0) target = $region37
    $region36: #{tpu_custom_call.1} parent=1 // pred_region
      %101 = dma.done [#allocation3], 128
    $region37: #{tpu_custom_call.1} parent=1 // pred_fallthru
      _
    // Predicated region
    $region38: #{tpu_custom_call.1} parent=1 // pred_check
      _
    $region39: #{tpu_custom_call.1} parent=1 // pred_check_branch
      %103 = sbr.rel (0) target = $region41
    $region40: #{tpu_custom_call.1} parent=1 // pred_region
      %105 = dma.done [#allocation6], 256
    $region41: #{tpu_custom_call.1} parent=1 // pred_fallthru
      _
    // Predicated region
    $region42: #{tpu_custom_call.1} parent=1 // pred_check
      _
    $region43: #{tpu_custom_call.1} parent=1 // pred_check_branch
      %107 = sbr.rel (0) target = $region45
    $region44: #{tpu_custom_call.1} parent=1 // pred_region
      %109 = dma.done [#allocation6], 1024
    $region45: #{tpu_custom_call.1} parent=1 // pred_fallthru
      _
    // Predicated region
    $region46: #{tpu_custom_call.1} parent=1 // pred_check
      _
    $region47: #{tpu_custom_call.1} parent=1 // pred_check_branch
      %111 = sbr.rel (0) target = $region49
    $region48: #{tpu_custom_call.1} parent=1 // pred_region
      %113 = dma.done [#allocation9], 1024
    $region49: #{tpu_custom_call.1} parent=1 // pred_fallthru
      _
    // Predicated region
    $region50: #{tpu_custom_call.1} parent=1 // pred_check
      _
    $region51: #{tpu_custom_call.1} parent=1 // pred_check_branch
      %115 = sbr.rel (0) target = $region53
    $region52: #{tpu_custom_call.1} parent=1 // pred_region
      %117 = dma.done [#allocation9], 1024
    $region53: #{tpu_custom_call.1} parent=1 // pred_fallthru
      _
    // Predicated region
    $region54: #{tpu_custom_call.1} parent=1 // pred_check
      _
    $region55: #{tpu_custom_call.1} parent=1 // pred_check_branch
      %119 = sbr.rel (0) target = $region57
    $region56: #{tpu_custom_call.1} parent=1 // pred_region
      %121 = dma.done [#allocation12], 1024
    $region57: #{tpu_custom_call.1} parent=1 // pred_fallthru
      _
    %v123 = vld [vmem:[%s6] sm:$0xf]
    %v124 = vld [vmem:[#allocation2] sm:$0xff]
    %v125 = vpack.c.bf16 %v124, %v124
    %v126 = vld [vmem:[#allocation5] sm:$0xf]
    %v127 = vld [vmem:[#allocation5 + $0x4] sm:$0xf]
    %v128 = vld [vmem:[#allocation5 + $0x8] sm:$0xf]
    %v129 = vld [vmem:[#allocation5 + $0xc] sm:$0xf]
    %v130 = vperm.slane %v123, 0
    %v135 = vunpack.c.l.b16 %v126
    %v136 = vunpack.c.l.b16 %v127
    %v137 = vunpack.c.l.b16 %v128
    %v138 = vunpack.c.l.b16 %v129
    %v139 = vpack.c.b16 %v136, %v135
    %v140 = vpack.c.b16 %v138, %v137
    %vm143 = vcmask 261120
    %v145 = vsel %vm143, %v125, 0
    %147 = vmatpush.bf16.msra.mxu0 0
    %148 = vmatpush.bf16.msra.mxu0 0
    %149 = vmatpush.bf16.msra.mxu0 0
    %150 = vmatpush.bf16.msra.mxu0 0
    %151 = vmatpush.bf16.msra.mxu0 0
    %152 = vmatpush.bf16.msra.mxu0 0
    %153 = vmatpush.bf16.msra.mxu0 %v140
    %154 = vmatpush.bf16.msra.mxu0 %v139
    %155 = vmatmul.bf16.gmra.mxu0 %v145
    %v156 = vpop.f32.mrf.mxu0
    %v157 = vadd.f32 %v130, %v156
    %v158 = vpop.f32.mrf.mxu0
    %159 = vdwg.mxu0
    %v160 = vmax.f32 %v157, 0.0
    %v161 = vpack.c.bf16 %v160, %v160
    %v162 = vld [vmem:[#allocation7] sm:$0xf]
    %v163 = vld [vmem:[#allocation7 + $0x4] sm:$0xf]
    %v164 = vld [vmem:[#allocation7 + $0x8] sm:$0xf]
    %v165 = vld [vmem:[#allocation7 + $0xc] sm:$0xf]
    %v166 = vld [vmem:[#allocation7 + $0x10] sm:$0xf]
    %v167 = vld [vmem:[#allocation7 + $0x14] sm:$0xf]
    %v168 = vld [vmem:[#allocation7 + $0x18] sm:$0xf]
    %v169 = vld [vmem:[#allocation7 + $0x1c] sm:$0xf]
    %v170 = vld [vmem:[#allocation7 + $0x20] sm:$0xf]
    %v171 = vld [vmem:[#allocation7 + $0x24] sm:$0xf]
    %v172 = vld [vmem:[#allocation7 + $0x28] sm:$0xf]
    %v173 = vld [vmem:[#allocation7 + $0x2c] sm:$0xf]
    %v174 = vld [vmem:[#allocation7 + $0x30] sm:$0xf]
    %v175 = vld [vmem:[#allocation7 + $0x34] sm:$0xf]
    %v176 = vld [vmem:[#allocation7 + $0x38] sm:$0xf]
    %v177 = vld [vmem:[#allocation7 + $0x3c] sm:$0xf]
    %v178 = vperm.slane %v123, 1
    %v195 = vunpack.c.l.b16 %v162
    %v196 = vunpack.c.l.b16 %v163
    %v197 = vunpack.c.l.b16 %v164
    %v198 = vunpack.c.l.b16 %v165
    %v199 = vunpack.c.l.b16 %v166
    %v200 = vunpack.c.l.b16 %v167
    %v201 = vunpack.c.l.b16 %v168
    %v202 = vunpack.c.l.b16 %v169
    %v203 = vunpack.c.l.b16 %v170
    %v204 = vunpack.c.l.b16 %v171
    %v205 = vunpack.c.l.b16 %v172
    %v206 = vunpack.c.l.b16 %v173
    %v207 = vunpack.c.l.b16 %v174
    %v208 = vunpack.c.l.b16 %v175
    %v209 = vunpack.c.l.b16 %v176
    %v210 = vunpack.c.l.b16 %v177
    %v211 = vpack.c.b16 %v196, %v195
    %v212 = vpack.c.b16 %v198, %v197
    %v213 = vpack.c.b16 %v200, %v199
    %v214 = vpack.c.b16 %v202, %v201
    %v215 = vpack.c.b16 %v204, %v203
    %v216 = vpack.c.b16 %v206, %v205
    %v217 = vpack.c.b16 %v208, %v207
    %v218 = vpack.c.b16 %v210, %v209
    %227 = vmatpush.bf16.msra.mxu0 %v218
    %228 = vmatpush.bf16.msra.mxu0 %v217
    %229 = vmatpush.bf16.msra.mxu0 %v216
    %230 = vmatpush.bf16.msra.mxu0 %v215
    %231 = vmatpush.bf16.msra.mxu0 %v214
    %232 = vmatpush.bf16.msra.mxu0 %v213
    %233 = vmatpush.bf16.msra.mxu0 %v212
    %234 = vmatpush.bf16.msra.mxu0 %v211
    %235 = vmatmul.bf16.gmra.mxu0 %v161
    %v236 = vpop.f32.mrf.mxu0
    %v237 = vadd.f32 %v178, %v236
    %v238 = vpop.f32.mrf.mxu0
    %239 = vdwg.mxu0
    %v240 = vmax.f32 %v237, 0.0
    %v241 = vpack.c.bf16 %v240, %v240
    %v242 = vld [vmem:[#allocation8] sm:$0xf]
    %v243 = vld [vmem:[#allocation8 + $0x4] sm:$0xf]
    %v244 = vld [vmem:[#allocation8 + $0x8] sm:$0xf]
    %v245 = vld [vmem:[#allocation8 + $0xc] sm:$0xf]
    %v246 = vld [vmem:[#allocation8 + $0x10] sm:$0xf]
    %v247 = vld [vmem:[#allocation8 + $0x14] sm:$0xf]
    %v248 = vld [vmem:[#allocation8 + $0x18] sm:$0xf]
    %v249 = vld [vmem:[#allocation8 + $0x1c] sm:$0xf]
    %v250 = vld [vmem:[#allocation8 + $0x20] sm:$0xf]
    %v251 = vld [vmem:[#allocation8 + $0x24] sm:$0xf]
    %v252 = vld [vmem:[#allocation8 + $0x28] sm:$0xf]
    %v253 = vld [vmem:[#allocation8 + $0x2c] sm:$0xf]
    %v254 = vld [vmem:[#allocation8 + $0x30] sm:$0xf]
    %v255 = vld [vmem:[#allocation8 + $0x34] sm:$0xf]
    %v256 = vld [vmem:[#allocation8 + $0x38] sm:$0xf]
    %v257 = vld [vmem:[#allocation8 + $0x3c] sm:$0xf]
    %v258 = vperm.slane %v123, 2
    %v275 = vunpack.c.l.b16 %v242
    %v276 = vunpack.c.l.b16 %v243
    %v277 = vunpack.c.l.b16 %v244
    %v278 = vunpack.c.l.b16 %v245
    %v279 = vunpack.c.l.b16 %v246
    %v280 = vunpack.c.l.b16 %v247
    %v281 = vunpack.c.l.b16 %v248
    %v282 = vunpack.c.l.b16 %v249
    %v283 = vunpack.c.l.b16 %v250
    %v284 = vunpack.c.l.b16 %v251
    %v285 = vunpack.c.l.b16 %v252
    %v286 = vunpack.c.l.b16 %v253
    %v287 = vunpack.c.l.b16 %v254
    %v288 = vunpack.c.l.b16 %v255
    %v289 = vunpack.c.l.b16 %v256
    %v290 = vunpack.c.l.b16 %v257
    %v291 = vpack.c.b16 %v276, %v275
    %v292 = vpack.c.b16 %v278, %v277
    %v293 = vpack.c.b16 %v280, %v279
    %v294 = vpack.c.b16 %v282, %v281
    %v295 = vpack.c.b16 %v284, %v283
    %v296 = vpack.c.b16 %v286, %v285
    %v297 = vpack.c.b16 %v288, %v287
    %v298 = vpack.c.b16 %v290, %v289
    %307 = vmatpush.bf16.msra.mxu0 %v298
    %308 = vmatpush.bf16.msra.mxu0 %v297
    %309 = vmatpush.bf16.msra.mxu0 %v296
    %310 = vmatpush.bf16.msra.mxu0 %v295
    %311 = vmatpush.bf16.msra.mxu0 %v294
    %312 = vmatpush.bf16.msra.mxu0 %v293
    %313 = vmatpush.bf16.msra.mxu0 %v292
    %314 = vmatpush.bf16.msra.mxu0 %v291
    %315 = vmatmul.bf16.gmra.mxu0 %v241
    %v316 = vpop.f32.mrf.mxu0
    %v317 = vadd.f32 %v258, %v316
    %v318 = vpop.f32.mrf.mxu0
    %319 = vdwg.mxu0
    %v320 = vmax.f32 %v317, 0.0
    %v321 = vpack.c.bf16 %v320, %v320
    %v322 = vld [vmem:[#allocation10] sm:$0xf]
    %v323 = vld [vmem:[#allocation10 + $0x4] sm:$0xf]
    %v324 = vld [vmem:[#allocation10 + $0x8] sm:$0xf]
    %v325 = vld [vmem:[#allocation10 + $0xc] sm:$0xf]
    %v326 = vld [vmem:[#allocation10 + $0x10] sm:$0xf]
    %v327 = vld [vmem:[#allocation10 + $0x14] sm:$0xf]
    %v328 = vld [vmem:[#allocation10 + $0x18] sm:$0xf]
    %v329 = vld [vmem:[#allocation10 + $0x1c] sm:$0xf]
    %v330 = vld [vmem:[#allocation10 + $0x20] sm:$0xf]
    %v331 = vld [vmem:[#allocation10 + $0x24] sm:$0xf]
    %v332 = vld [vmem:[#allocation10 + $0x28] sm:$0xf]
    %v333 = vld [vmem:[#allocation10 + $0x2c] sm:$0xf]
    %v334 = vld [vmem:[#allocation10 + $0x30] sm:$0xf]
    %v335 = vld [vmem:[#allocation10 + $0x34] sm:$0xf]
    %v336 = vld [vmem:[#allocation10 + $0x38] sm:$0xf]
    %v337 = vld [vmem:[#allocation10 + $0x3c] sm:$0xf]
    %v338 = vperm.slane %v123, 3
    %v355 = vunpack.c.l.b16 %v322
    %v356 = vunpack.c.l.b16 %v323
    %v357 = vunpack.c.l.b16 %v324
    %v358 = vunpack.c.l.b16 %v325
    %v359 = vunpack.c.l.b16 %v326
    %v360 = vunpack.c.l.b16 %v327
    %v361 = vunpack.c.l.b16 %v328
    %v362 = vunpack.c.l.b16 %v329
    %v363 = vunpack.c.l.b16 %v330
    %v364 = vunpack.c.l.b16 %v331
    %v365 = vunpack.c.l.b16 %v332
    %v366 = vunpack.c.l.b16 %v333
    %v367 = vunpack.c.l.b16 %v334
    %v368 = vunpack.c.l.b16 %v335
    %v369 = vunpack.c.l.b16 %v336
    %v370 = vunpack.c.l.b16 %v337
    %v371 = vpack.c.b16 %v356, %v355
    %v372 = vpack.c.b16 %v358, %v357
    %v373 = vpack.c.b16 %v360, %v359
    %v374 = vpack.c.b16 %v362, %v361
    %v375 = vpack.c.b16 %v364, %v363
    %v376 = vpack.c.b16 %v366, %v365
    %v377 = vpack.c.b16 %v368, %v367
    %v378 = vpack.c.b16 %v370, %v369
    %387 = vmatpush.bf16.msra.mxu0 %v378
    %388 = vmatpush.bf16.msra.mxu0 %v377
    %389 = vmatpush.bf16.msra.mxu0 %v376
    %390 = vmatpush.bf16.msra.mxu0 %v375
    %391 = vmatpush.bf16.msra.mxu0 %v374
    %392 = vmatpush.bf16.msra.mxu0 %v373
    %393 = vmatpush.bf16.msra.mxu0 %v372
    %394 = vmatpush.bf16.msra.mxu0 %v371
    %395 = vmatmul.bf16.gmra.mxu0 %v321
    %v396 = vpop.f32.mrf.mxu0
    %v397 = vadd.f32 %v338, %v396
    %v398 = vpop.f32.mrf.mxu0
    %399 = vdwg.mxu0
    %v400 = vmax.f32 %v397, 0.0
    %v401 = vpack.c.bf16 %v400, %v400
    %v402 = vld [vmem:[#allocation11] sm:$0xf]
    %v403 = vld [vmem:[#allocation11 + $0x4] sm:$0xf]
    %v404 = vld [vmem:[#allocation11 + $0x8] sm:$0xf]
    %v405 = vld [vmem:[#allocation11 + $0xc] sm:$0xf]
    %v406 = vld [vmem:[#allocation11 + $0x10] sm:$0xf]
    %v407 = vld [vmem:[#allocation11 + $0x14] sm:$0xf]
    %v408 = vld [vmem:[#allocation11 + $0x18] sm:$0xf]
    %v409 = vld [vmem:[#allocation11 + $0x1c] sm:$0xf]
    %v410 = vld [vmem:[#allocation11 + $0x20] sm:$0xf]
    %v411 = vld [vmem:[#allocation11 + $0x24] sm:$0xf]
    %v412 = vld [vmem:[#allocation11 + $0x28] sm:$0xf]
    %v413 = vld [vmem:[#allocation11 + $0x2c] sm:$0xf]
    %v414 = vld [vmem:[#allocation11 + $0x30] sm:$0xf]
    %v415 = vld [vmem:[#allocation11 + $0x34] sm:$0xf]
    %v416 = vld [vmem:[#allocation11 + $0x38] sm:$0xf]
    %v417 = vld [vmem:[#allocation11 + $0x3c] sm:$0xf]
    %v418 = vld [vmem:[%s7] sm:$0x1]
    %v420 = vperm.slane %v418, 0
    %v438 = vunpack.c.l.b16 %v402
    %v439 = vunpack.c.l.b16 %v403
    %v440 = vunpack.c.l.b16 %v404
    %v441 = vunpack.c.l.b16 %v405
    %v442 = vunpack.c.l.b16 %v406
    %v443 = vunpack.c.l.b16 %v407
    %v444 = vunpack.c.l.b16 %v408
    %v445 = vunpack.c.l.b16 %v409
    %v446 = vunpack.c.l.b16 %v410
    %v447 = vunpack.c.l.b16 %v411
    %v448 = vunpack.c.l.b16 %v412
    %v449 = vunpack.c.l.b16 %v413
    %v450 = vunpack.c.l.b16 %v414
    %v451 = vunpack.c.l.b16 %v415
    %v452 = vunpack.c.l.b16 %v416
    %v453 = vunpack.c.l.b16 %v417
    %v454 = vpack.c.b16 %v439, %v438
    %v455 = vpack.c.b16 %v441, %v440
    %v456 = vpack.c.b16 %v443, %v442
    %v457 = vpack.c.b16 %v445, %v444
    %v458 = vpack.c.b16 %v447, %v446
    %v459 = vpack.c.b16 %v449, %v448
    %v460 = vpack.c.b16 %v451, %v450
    %v461 = vpack.c.b16 %v453, %v452
    %470 = vmatpush.bf16.msra.mxu0 %v461
    %471 = vmatpush.bf16.msra.mxu0 %v460
    %472 = vmatpush.bf16.msra.mxu0 %v459
    %473 = vmatpush.bf16.msra.mxu0 %v458
    %474 = vmatpush.bf16.msra.mxu0 %v457
    %475 = vmatpush.bf16.msra.mxu0 %v456
    %476 = vmatpush.bf16.msra.mxu0 %v455
    %477 = vmatpush.bf16.msra.mxu0 %v454
    %478 = vmatmul.bf16.gmra.mxu0 %v401
    %v479 = vpop.f32.mrf.mxu0
    %v480 = vadd.f32 %v420, %v479
    %v481 = vpop.f32.mrf.mxu0
    %482 = vdwg.mxu0
    %483 = vst [vmem:[#allocation13] sm:$0xff] %v480
    // Predicated region
    $region58: #{tpu_custom_call.1} parent=1 // pred_check
      _
    $region59: #{tpu_custom_call.1} parent=1 // pred_check_branch
      %485 = sbr.rel (0) target = $region61
    $region60: #{tpu_custom_call.1} parent=1 // pred_region
      %487 = vsyncadd [#allocation4], 0
      %s489 = sshll.u32 [#allocation13], 4
      %s490 = int_to_ptr.vmem [resolvable:$true] %s489
      %s491 = sshll.u32 %s8, 4
      %s492 = int_to_ptr.hbm [resolvable:$true] %s491
      %494 = dma.vmem_to_hbm [thread:$0]  %s490, 128, %s492, [#allocation4]
    $region61: #{tpu_custom_call.1} parent=1 // pred_fallthru
      _
    // Predicated region
    $region62: #{tpu_custom_call.1} parent=1 // pred_check
      _
    $region63: #{tpu_custom_call.1} parent=1 // pred_check_branch
      %496 = sbr.rel (0) target = $region65
    $region64: #{tpu_custom_call.1} parent=1 // pred_region
      %498 = dma.done [#allocation4], 128
    $region65: #{tpu_custom_call.1} parent=1 // pred_fallthru
      _
    %499 = vsyncpa [#allocation3], 1
    %500 = vsyncpa [#allocation6], 1
    %501 = vsyncpa [#allocation9], 1
    %502 = vsyncpa [#allocation12], 1
    %503 = vsyncpa [#allocation4], 1

</llo_original>
